<compile_context>
chip_gen: v6e
topology: v6e:2x2x1
jax: 0.10.0
libtpu: 0.0.40
codegen_flags: <defaults>
</compile_context>

<pallas_src>
import jax
import jax.numpy as jnp
from jax.experimental import pallas as pl
from jax.experimental.pallas import tpu as pltpu


def _drop_path_kernel(scale_ref, x_ref, o_ref):
    # scale_ref : (B,) float32 scalar-prefetch vector in SMEM.
    # x_ref/o_ref: (1, TN, D) VMEM tiles.
    b = pl.program_id(0)
    scale = scale_ref[b].astype(o_ref.dtype)
    o_ref[...] = x_ref[...] * scale


def _choose_tile_n(n, d, itemsize):
    """Largest sequence tile keeping one block near ~2 MiB (sublane multiple of 8)."""
    target_bytes = 2 * 1024 * 1024
    max_rows = max(1, target_bytes // max(1, d * itemsize))
    if n <= max_rows:
        return n                          # full axis -> always a legal block dim
    return max(8, (max_rows // 8) * 8)    # multiple of 8 -> legal sublane tiling


def drop_path(x, drop_prob: float = 0.0, training: bool = False, seed: int = 0):
    """Pallas TPU implementation of stochastic depth (per-sample drop path)."""
    if drop_prob == 0.0 or not training:
        return x

    keep_prob = 1.0 - drop_prob
    orig_shape = x.shape
    B = orig_shape[0]

    # Present a lane-dense 3-D (B, N, D) view to the kernel regardless of ndim.
    if x.ndim == 3:
        x3 = x
    else:
        flat = 1
        for s in orig_shape[1:]:
            flat *= s
        if flat % 128 == 0:
            d = 128
            while flat % (d * 2) == 0 and d * 2 <= 1024:
                d *= 2
        else:
            d = flat
        x3 = x.reshape(B, flat // d, d)

    Bn, N, D = x3.shape
    tn = _choose_tile_n(N, D, jnp.dtype(x.dtype).itemsize)
    grid = (Bn, pl.cdiv(N, tn))

    # Per-sample keep/drop scale, computed ONCE outside the hot loop.
    u = jax.random.uniform(jax.random.PRNGKey(seed), (Bn,), dtype=jnp.float32)
    keep = jnp.floor(jnp.float32(keep_prob) + u)          # 0.0 or 1.0 per sample
    scale = keep * jnp.float32(1.0 / keep_prob)           # (B,) float32

    out3 = pl.pallas_call(
        _drop_path_kernel,
        out_shape=jax.ShapeDtypeStruct((Bn, N, D), x.dtype),
        grid_spec=pltpu.PrefetchScalarGridSpec(
            num_scalar_prefetch=1,                        # scale -> SMEM
            grid=grid,
            in_specs=[
                pl.BlockSpec((1, tn, D), lambda b, n, scale_ref: (b, n, 0)),
            ],
            out_specs=pl.BlockSpec((1, tn, D), lambda b, n, scale_ref: (b, n, 0)),
        ),
        compiler_params=pltpu.CompilerParams(
            dimension_semantics=("parallel", "parallel"),
        ),
    )(scale, x3)

    return out3.reshape(orig_shape)


class DropPath:
    """Mirror of the PyTorch DropPath module (forward pass only)."""

    def __init__(self, drop_prob=None):
        self.drop_prob = drop_prob
        self.training = True

    def __call__(self, x, seed: int = 0):
        return drop_path(x, self.drop_prob or 0.0, self.training, seed)


if __name__ == "__main__":
    key = jax.random.PRNGKey(0)
    B, N, D = 4, 16, 128
    x = jax.random.normal(key, (B, N, D), dtype=jnp.float32)

    drop_prob = 0.3
    seed = 1234
    module = DropPath(drop_prob=drop_prob)
    module.training = True
    out = jax.block_until_ready(module(x, seed=seed))

    keep_prob = 1.0 - drop_prob
    # Reference using the same per-sample decisions the wrapper feeds the kernel.
    u = jax.random.uniform(jax.random.PRNGKey(seed), (B,), dtype=jnp.float32)
    keep = jnp.floor(jnp.float32(keep_prob) + u)
    expected = x * (keep / keep_prob)[:, None, None]
    assert jnp.allclose(out, expected, atol=1e-5), "kernel output != reference"

    # Every sample must be either fully zeroed or scaled by 1/keep_prob.
    for b in range(B):
        is_kept = bool(jnp.allclose(out[b], x[b] / keep_prob, atol=1e-5))
        is_dropped = bool(jnp.allclose(out[b], 0.0, atol=1e-6))
        assert is_kept or is_dropped, f"sample {b} is neither kept nor dropped"

    # Non-3D input exercises the lane-dense reshape path.
    x4 = jax.random.normal(jax.random.PRNGKey(1), (2, 4, 16, 16), dtype=jnp.float32)
    out4 = jax.block_until_ready(module(x4, seed=seed))
    u4 = jax.random.uniform(jax.random.PRNGKey(seed), (2,), dtype=jnp.float32)
    keep4 = jnp.floor(jnp.float32(keep_prob) + u4)
    expected4 = x4 * (keep4 / keep_prob)[:, None, None, None]
    assert jnp.allclose(out4, expected4, atol=1e-5), "4D kernel output != reference"

    # Eval mode / drop_prob == 0 is identity (no kernel launch).
    module.training = False
    out_eval = jax.block_until_ready(module(x, seed=seed))
    assert bool(jnp.array_equal(out_eval, x)), "eval mode must be identity"

    print("KERNEL_OK")
</pallas_src>

<mosaic_0001>
module attributes {stable_mosaic.version = 11 : i64} {
  func.func @_drop_path_kernel(%arg0: i32, %arg1: i32, %arg2: memref<4xf32, #tpu.memory_space<smem>>, %arg3: memref<1x16x128xf32, #tpu.memory_space<vmem>>, %arg4: memref<1x16x128xf32, #tpu.memory_space<vmem>>) attributes {dimension_semantics = [#tpu.dimension_semantics<parallel>, #tpu.dimension_semantics<parallel>], iteration_bounds = array<i64: 4, 1>, scalar_prefetch = 1 : i64, scratch_operands = 0 : i64, tpu.core_type = #tpu.core_type<tc>, window_params = [{transform_indices = @transform_0, window_bounds = array<i64: 1, 16, 128>}, {transform_indices = @transform_1, window_bounds = array<i64: 1, 16, 128>}]} {
    %0 = arith.index_cast %arg0 : i32 to index
    %1 = memref.load %arg2[%0] : memref<4xf32, #tpu.memory_space<smem>>
    %c0 = arith.constant 0 : index
    %c0_0 = arith.constant 0 : index
    %c0_1 = arith.constant 0 : index
    %2 = vector.load %arg3[%c0, %c0_0, %c0_1] : memref<1x16x128xf32, #tpu.memory_space<vmem>>, vector<1x16x128xf32>
    %3 = vector.broadcast %1 : f32 to vector<1x16x128xf32>
    %4 = arith.mulf %2, %3 : vector<1x16x128xf32>
    %c0_2 = arith.constant 0 : index
    %c0_3 = arith.constant 0 : index
    %c0_4 = arith.constant 0 : index
    %5 = vector.load %arg4[%c0_2, %c0_3, %c0_4] : memref<1x16x128xf32, #tpu.memory_space<vmem>>, vector<1x16x128xf32>
    tpu.vector_store %arg4[%c0_2, %c0_3, %c0_4], %4 {strides = array<i32>} : memref<1x16x128xf32, #tpu.memory_space<vmem>>, vector<1x16x128xf32>,
    return
  }
  func.func @transform_0(%arg0: i32, %arg1: i32, %arg2: memref<4xf32, #tpu.memory_space<smem>>) -> (i32, i32, i32) {
    %c0_i32 = arith.constant 0 : i32
    %c0_i32_0 = arith.constant 0 : i32
    return %arg0, %arg1, %c0_i32 : i32, i32, i32
  }
  func.func @transform_1(%arg0: i32, %arg1: i32, %arg2: memref<4xf32, #tpu.memory_space<smem>>) -> (i32, i32, i32) {
    %c0_i32 = arith.constant 0 : i32
    %c0_i32_0 = arith.constant 0 : i32
    return %arg0, %arg1, %c0_i32 : i32, i32, i32
  }
}

</mosaic_0001>

<llo_original>
// kernel: tpu_custom_call.1
$region0: #{tpu_custom_call.1}
  #allocation0 [shape = 'u32[]', space=smem, size = 0x4, offset = 0x4, fixed_abs, tag = 'smem constant byte address 0x4 - core index']
  #allocation1 [shape = 'u32[144,128]{1,0:T(1,128)}', space=vmem, size = 0x12000, scoped, tag = 'internal scratch']
  #allocation2 [shape = 's32[1]{0}', space=sflag, size = 0x4, scoped, tag = 'scoped memory for tpu_custom_call.1']
  #allocation3 [shape = 'u8[512]{0}', space=smem, size = 0x200, scoped, tag = 'prefetched SMEM operand 0']
  %s0 = inlined_call_operand.hbm [shape: f32[4], index: 0, kind: input, shape index: {}]
  %s1 = inlined_call_operand.hbm [shape: f32[4,16,128], index: 1, kind: input, shape index: {}]
  %s2 = inlined_call_operand.hbm [shape: f32[4,16,128], index: 2, kind: output, shape index: {}]
  %s3 = sld [smem:[#allocation0]]
  $region41: #{tpu_custom_call.1} parent=0
    _
  %s5 = ssub.s32 1, %s3
  %s6 = scalar_select 0, %s5, %s3
  %8 = dma.hbm_to_smem %s0, 16, [#allocation3], [#allocation2]
  %9 = dma.done [#allocation2], 16
  %10 = sfence
  $region1: #{tpu_custom_call.1} parent=0
    #allocation4 [shape = 'u8[16384]{0}', space=vmem, size = 0x4000, scoped, tag = 'input window, operand 1']
    #allocation5 [shape = 's32[2]{0}', space=sflag, size = 0x8, scoped, tag = 'scoped memory for tpu_custom_call.1']
    #allocation6 [shape = 's32[2]{0}', space=sflag, size = 0x8, scoped, tag = 'scoped memory for tpu_custom_call.1']
    #allocation7 [shape = 'u8[16384]{0}', space=vmem, size = 0x4000, scoped, tag = 'output window, operand 0']
    %11 = vsyncpa [#allocation5], 0
    %s12 = scalar_lea.sflag [#allocation5], 1
    %13 = vsyncpa %s12, 0
    %14 = vsyncpa [#allocation6], 0
    %s15 = scalar_lea.sflag [#allocation6], 1
    %16 = vsyncpa %s15, 0
    loop: start=0, step=1, limit=6
    $region2: #{tpu_custom_call.1} parent=1 // loop_pre_header
      _
    $region3: #{tpu_custom_call.1} parent=1 // loop_header
      %s18 = sphi 0, %s22
      %p19 = scmp.ge.s32.totalorder %s18, 6
      %s25 = sphi 0, %s37
      %s26 = sphi 0, %s33
      %s27 = sphi 0, %s25
      %s28 = sphi 0, %s26
      %s29 = sphi 0, %s27
      %s30 = sphi 0, %s28
      %s42 = sphi 0, %s44
      %s45 = sphi 0, %s42
      %s46 = sphi 0, %s45
      %s62 = sphi 0, %s46
      %s70 = sphi 0, %s72
      %s73 = sphi 0, %s70
      %s74 = sphi 0, %s73
      %s90 = sphi 0, %s74
    $region4: #{tpu_custom_call.1} parent=1 // loop_header_branch
      %21 = sbr.rel (%p19) target = $region8
    $region5: #{tpu_custom_call.1} parent=1 // loop_body
      %s23 = ssub.s32 %s18, 1
      %s24 = ssub.s32 %s18, 2
      %s31 = sadd.s32 1, %s26
      %p32 = scmp.ge.s32.totalorder %s31, 1
      %s33 = scalar_select %p32, 0, %s31
      %s34 = sadd.s32 1, %s25
      %s35 = scalar_select %p32, %s34, %s25
      %p36 = scmp.ge.s32.totalorder %s35, 4
      %s37 = scalar_select %p36, 0, %s35
      %s38 = ssub.s32 %s25, %s37
      %s39 = ssub.s32 %s26, %s33
      %s40 = sor.u32 %s38, %s39
      %p41 = scmp.eq.s32.totalorder %s40, 0
      %s43 = sadd.s32 %s42, 1
      %s44 = scalar_select %p41, %s42, %s43
      %p47 = pneg %p41
      %p48 = scmp.eq.s32.totalorder %s18, 3
      %p49 = por %p47, %p48
      %p50 = scmp.ne.s32.totalorder %s42, %s45
      %p51 = scmp.eq.s32.totalorder %s18, 0
      %p52 = por %p50, %p51
      %p53 = scmp.ne.s32.totalorder %s42, %s45
      %p54 = scmp.eq.s32.totalorder %s23, 3
      %p55 = por %p53, %p54
      %p56 = scmp.ne.s32.totalorder %s45, %s46
      %p57 = scmp.eq.s32.totalorder %s23, 0
      %p58 = por %p56, %p57
      %p59 = scmp.ne.s32.totalorder %s45, %s46
      %p60 = scmp.eq.s32.totalorder %s24, 3
      %p61 = por %p59, %p60
      %p63 = scmp.ne.s32.totalorder %s46, %s62
      %p64 = scmp.eq.s32.totalorder %s24, 0
      %p65 = por %p63, %p64
      %s66 = ssub.s32 %s25, %s37
      %s67 = ssub.s32 %s26, %s33
      %s68 = sor.u32 %s66, %s67
      %p69 = scmp.eq.s32.totalorder %s68, 0
      %s71 = sadd.s32 %s70, 1
      %s72 = scalar_select %p69, %s70, %s71
      %p75 = pneg %p69
      %p76 = scmp.eq.s32.totalorder %s18, 3
      %p77 = por %p75, %p76
      %p78 = scmp.ne.s32.totalorder %s70, %s73
      %p79 = scmp.eq.s32.totalorder %s18, 0
      %p80 = por %p78, %p79
      %p81 = scmp.ne.s32.totalorder %s70, %s73
      %p82 = scmp.eq.s32.totalorder %s23, 3
      %p83 = por %p81, %p82
      %p84 = scmp.ne.s32.totalorder %s73, %s74
      %p85 = scmp.eq.s32.totalorder %s23, 0
      %p86 = por %p84, %p85
      %p87 = scmp.ne.s32.totalorder %s73, %s74
      %p88 = scmp.eq.s32.totalorder %s24, 3
      %p89 = por %p87, %p88
      %p91 = scmp.ne.s32.totalorder %s74, %s90
      %p92 = scmp.eq.s32.totalorder %s24, 0
      %p93 = por %p91, %p92
      %p94 = scmp.le.s32.totalorder 1, %s18
      %p95 = scmp.lt.s32.totalorder %s18, 5
      %p96 = pnand %p94, %p95
      %p97 = pneg %p96
      // Predicated region
      $region9: #{tpu_custom_call.1} parent=5 // pred_check
        _
      $region10: #{tpu_custom_call.1} parent=5 // pred_check_branch
        %99 = sbr.rel (%p96) target = $region12
      $region11: #{tpu_custom_call.1} parent=5 // pred_region
        %s100 = ssub.s32 %s18, 1
      $region12: #{tpu_custom_call.1} parent=5 // pred_fallthru
        _
      %p101 = scmp.lt.s32.totalorder %s18, 4
      // Predicated region
      $region13: #{tpu_custom_call.1} parent=5 // pred_check
        %p102 = pneg %p101
      $region14: #{tpu_custom_call.1} parent=5 // pred_check_branch
        %104 = sbr.rel (%p102) target = $region16
      $region15: #{tpu_custom_call.1} parent=5 // pred_region
        // Predicated region
        $region17: #{tpu_custom_call.1} parent=15 // pred_check
          %p105 = pneg %p52
        $region18: #{tpu_custom_call.1} parent=15 // pred_check_branch
          %107 = sbr.rel (%p105) target = $region20
        $region19: #{tpu_custom_call.1} parent=15 // pred_region
          %s108 = sand.u32 %s42, 1
          %s109 = scalar_lea.sflag [#allocation5], %s108
          %s110 = sand.u32 %s42, 1
          %s111 = smul.addr %s110, 16
          %s112 = scalar_lea.vmem [#allocation4], %s111
          %s113 = smul.u32 2, %s26
          %s115 = ssub.s32 256, 256
          %116 = vsyncadd %s109, %s115
          %s117 = smul.addr %s25, 2
          %s118 = sadd.s32 %s113, %s117
          %s119 = smul.addr %s118, 128
          %s120 = scalar_lea.hbm %s1, %s119
          %s121 = sshll.u32 %s112, 4
          %s122 = int_to_ptr.vmem [resolvable:$true] %s121
          %127 = dma.hbm_to_vmem [thread:$0]  %s120, 256, %s122, %s109, 128, 128, 8
        $region20: #{tpu_custom_call.1} parent=15 // pred_fallthru
          _
      $region16: #{tpu_custom_call.1} parent=5 // pred_fallthru
        _
      %p128 = scmp.le.s32.totalorder 1, %s18
      %p129 = scmp.lt.s32.totalorder %s18, 5
      %p130 = pnand %p128, %p129
      %p131 = pneg %p130
      // Predicated region
      $region21: #{tpu_custom_call.1} parent=5 // pred_check
        _
      $region22: #{tpu_custom_call.1} parent=5 // pred_check_branch
        %133 = sbr.rel (%p130) target = $region24
      $region23: #{tpu_custom_call.1} parent=5 // pred_region
        %s134 = ssub.s32 %s18, 1
        %s135 = sand.u32 %s45, 1
        %s136 = scalar_lea.sflag [#allocation5], %s135
        %s137 = sand.u32 %s45, 1
        %s138 = smul.addr %s137, 16
        %s139 = scalar_lea.vmem [#allocation4], %s138
        // Predicated region
        $region25: #{tpu_custom_call.1} parent=23 // pred_check
          %p140 = pneg %p58
        $region26: #{tpu_custom_call.1} parent=23 // pred_check_branch
          %142 = sbr.rel (%p140) target = $region28
        $region27: #{tpu_custom_call.1} parent=23 // pred_region
          %143 = dma.done %s136, 256
        $region28: #{tpu_custom_call.1} parent=23 // pred_fallthru
          _
        %s144 = sand.u32 %s45, 1
        %s145 = scalar_lea.sflag [#allocation5], %s144
        %s146 = sand.u32 %s45, 1
        %s147 = smul.addr %s146, 16
        %s148 = scalar_lea.vmem [#allocation4], %s147
        %p149 = pneg %p58
        %p150 = pneg %p55
        %p151 = pneg %p86
        %p152 = pneg %p83
        %s153 = sand.u32 %s73, 1
        %s154 = scalar_lea.sflag [#allocation6], %s153
        %s155 = sand.u32 %s73, 1
        %s156 = smul.addr %s155, 16
        %s157 = scalar_lea.vmem [#allocation7], %s156
        %s158 = smul.u32 2, %s28
        %s159 = smul.u32 2, %s28
        %s160 = sld [smem:[#allocation3 + %s27]]
        %v161 = vld [vmem:[%s139] sm:$0xff]
        %v162 = vld [vmem:[%s139 + $0x8] sm:$0xff]
        %v163 = vstv %s160
        %v164 = vmul.f32 %v161, %v163
        %v165 = vmul.f32 %v162, %v163
        %166 = vst [vmem:[%s157] sm:$0xff] %v164
        %167 = vst [vmem:[%s157 + $0x8] sm:$0xff] %v165
        %s168 = sand.u32 %s73, 1
        %s169 = scalar_lea.sflag [#allocation6], %s168
        %s170 = sand.u32 %s73, 1
        %s171 = smul.addr %s170, 16
        %s172 = scalar_lea.vmem [#allocation7], %s171
        // Predicated region
        $region29: #{tpu_custom_call.1} parent=23 // pred_check
          %p173 = pneg %p83
        $region30: #{tpu_custom_call.1} parent=23 // pred_check_branch
          %175 = sbr.rel (%p173) target = $region32
        $region31: #{tpu_custom_call.1} parent=23 // pred_region
          %s176 = smul.u32 2, %s28
          %s178 = ssub.s32 256, 256
          %179 = vsyncadd %s169, %s178
          %s180 = smul.addr %s27, 2
          %s181 = sadd.s32 %s176, %s180
          %s182 = smul.addr %s181, 128
          %s183 = scalar_lea.hbm %s2, %s182
          %s184 = sshll.u32 %s172, 4
          %s185 = int_to_ptr.vmem [resolvable:$true] %s184
          %190 = dma.vmem_to_hbm [thread:$0]  %s185, 256, %s183, %s169, 128, 128, 8
        $region32: #{tpu_custom_call.1} parent=23 // pred_fallthru
          _
      $region24: #{tpu_custom_call.1} parent=5 // pred_fallthru
        _
      %p191 = scmp.le.s32.totalorder 2, %s18
      // Predicated region
      $region33: #{tpu_custom_call.1} parent=5 // pred_check
        %p192 = pneg %p191
      $region34: #{tpu_custom_call.1} parent=5 // pred_check_branch
        %194 = sbr.rel (%p192) target = $region36
      $region35: #{tpu_custom_call.1} parent=5 // pred_region
        %s195 = ssub.s32 %s18, 2
        // Predicated region
        $region37: #{tpu_custom_call.1} parent=35 // pred_check
          %p196 = pneg %p89
        $region38: #{tpu_custom_call.1} parent=35 // pred_check_branch
          %198 = sbr.rel (%p196) target = $region40
        $region39: #{tpu_custom_call.1} parent=35 // pred_region
          %s199 = sand.u32 %s74, 1
          %s200 = scalar_lea.sflag [#allocation6], %s199
          %s201 = sand.u32 %s74, 1
          %s202 = smul.addr %s201, 16
          %s203 = scalar_lea.vmem [#allocation7], %s202
          %204 = dma.done %s200, 256
        $region40: #{tpu_custom_call.1} parent=35 // pred_fallthru
          _
      $region36: #{tpu_custom_call.1} parent=5 // pred_fallthru
        _
    $region6: #{tpu_custom_call.1} parent=1 // loop_footer
      %s22 = sadd.s32 1, %s18
    $region7: #{tpu_custom_call.1} parent=1 // loop_footer_branch
      %17 = sbr.rel target = $region3
    $region8: #{tpu_custom_call.1} parent=1 // loop_exit
      _
    %205 = vsyncpa [#allocation5], 1
    %s206 = scalar_lea.sflag [#allocation5], 1
    %207 = vsyncpa %s206, 1
    %208 = vsyncpa [#allocation6], 1
    %s209 = scalar_lea.sflag [#allocation6], 1
    %210 = vsyncpa %s209, 1

</llo_original>
